<compile_context>
chip_gen: v5e
topology: v5e:2x2
jax: 0.10.0
libtpu: 0.0.40
codegen_flags: <defaults>
</compile_context>

<pallas_src>
import jax
import jax.numpy as jnp
from jax import lax
from jax.experimental import pallas as pl
from jax.experimental.pallas import tpu as pltpu

LANE = 128  # TPU lane width


def _round_up(x, m):
    return ((x + m - 1) // m) * m


# ------------------------------------------------------------------ kernel ---
def critic_kernel(x_ref, w1_ref, b1_ref, w2_ref, b2_ref, w3_ref, b3_ref,
                  out_ref):
    cd = w1_ref.dtype
    # x tile: [tb, S] -> cast once to the matmul compute dtype.
    x = x_ref[...].astype(cd)

    # layer 1: [tb, S] @ [S, Hp] -> f32 accumulate, f32 bias + ReLU epilogue.
    h1 = jnp.dot(x, w1_ref[...], preferred_element_type=jnp.float32)
    h1 = jnp.maximum(h1 + b1_ref[...], 0.0)

    # layer 2: [tb, Hp] @ [Hp, Hp]
    h2 = jnp.dot(h1.astype(cd), w2_ref[...],
                 preferred_element_type=jnp.float32)
    h2 = jnp.maximum(h2 + b2_ref[...], 0.0)

    # layer 3 (value head), computed transposed so the output block is
    # lane-dense:  (O, Hp) contracted with (tb, Hp) on Hp -> (O, tb).
    v_t = lax.dot_general(w3_ref[...], h2.astype(cd),
                          dimension_numbers=(((1,), (1,)), ((), ())),
                          preferred_element_type=jnp.float32)
    out_ref[...] = (v_t + b3_ref[...]).astype(out_ref.dtype)  # b3: (O, 1)


# ------------------------------------------------- one-time param preparation
def prepare_params(params, compute_dtype=jnp.bfloat16):
    """One-time layout glue: transpose w1/w2 to [in, out], zero-pad the hidden
    dim to a multiple of 128 lanes, cast weights to the MXU compute dtype
    (pass jnp.float32 for exact f32 parity with PyTorch), keep biases f32.
    w3 stays in its original [O, H] orientation (the kernel does an NT dot)."""
    w1, b1 = params["w1"], params["b1"]      # [H, S], [H]
    w2, b2 = params["w2"], params["b2"]      # [H, H], [H]
    w3, b3 = params["w3"], params["b3"]      # [O, H], [O]
    H, S = w1.shape
    O = w3.shape[0]
    Hp = _round_up(H, LANE)
    pad_h = Hp - H

    w1t = jnp.pad(w1.T, ((0, 0), (0, pad_h)))            # [S,  Hp]
    w2t = jnp.pad(w2.T, ((0, pad_h), (0, pad_h)))        # [Hp, Hp]
    w3c = jnp.pad(w3, ((0, 0), (0, pad_h)))              # [O,  Hp]
    b1p = jnp.pad(b1, (0, pad_h)).reshape(1, Hp)
    b2p = jnp.pad(b2, (0, pad_h)).reshape(1, Hp)
    b3p = b3.reshape(O, 1)

    return {
        "w1t": w1t.astype(compute_dtype),
        "w2t": w2t.astype(compute_dtype),
        "w3c": w3c.astype(compute_dtype),
        "b1": b1p.astype(jnp.float32),
        "b2": b2p.astype(jnp.float32),
        "b3": b3p.astype(jnp.float32),
    }


# ----------------------------------------------------------------- wrapper ---
def critic_forward(x, prepped, *, tile_b=8192):
    """x: [B, state_size] (f32 or bf16).  prepped: output of prepare_params.
    Returns [B, output_size] float32."""
    B, S = x.shape
    O = prepped["w3c"].shape[0]
    assert prepped["w1t"].shape[0] == S, "state_size mismatch"
    assert tile_b % 256 == 0, "tile_b must be a multiple of 256"

    # Batch tile: largest multiple of 256 up to tile_b (amortizes the ~0.35 us
    # per-grid-step pipeline overhead).
    tb = min(_round_up(B, 256), tile_b)
    # Keep both v7x TensorCores busy: if there is enough work but the grid
    # would collapse to a single step, split the batch into two tiles.
    if B > 2048 and _round_up(B, tb) // tb < 2:
        tb = _round_up(pl.cdiv(B, 2), 256)
    B_pad = _round_up(B, tb)
    if B_pad != B:
        # Zero-padded rows produce bias-only values that are sliced off below;
        # nothing ever reduces over the batch axis, so this is harmless.
        x = jnp.pad(x, ((0, B_pad - B), (0, 0)))

    grid = (B_pad // tb,)

    def resident(arr):  # weights/biases: same block every step (VMEM-resident)
        return pl.BlockSpec(arr.shape, lambda i: (0, 0))

    out_t = pl.pallas_call(
        critic_kernel,
        out_shape=jax.ShapeDtypeStruct((O, B_pad), jnp.float32),
        grid=grid,
        in_specs=[
            pl.BlockSpec((tb, S), lambda i: (i, 0)),      # x: tiled over batch
            resident(prepped["w1t"]),
            resident(prepped["b1"]),
            resident(prepped["w2t"]),
            resident(prepped["b2"]),
            resident(prepped["w3c"]),
            resident(prepped["b3"]),
        ],
        # Transposed output: (O, tb) blocks -> lane-dense, unmasked stores.
        out_specs=pl.BlockSpec((O, tb), lambda i: (0, i)),
        compiler_params=pltpu.CompilerParams(
            dimension_semantics=("parallel",),  # shard batch across v7x TCs
            vmem_limit_bytes=48 * 1024 * 1024,  # > v5e 16MiB default, < v7x 64MiB physical
        ),
    )(x, prepped["w1t"], prepped["b1"], prepped["w2t"], prepped["b2"],
      prepped["w3c"], prepped["b3"])

    return out_t.T[:B]   # (B, O) float32


# ------------------------------------------------------- deterministic init --
def orthogonal(key, shape):
    """Deterministic stand-in for nn.init.orthogonal_."""
    rows, cols = shape
    n = max(rows, cols)
    a = jax.random.normal(key, (n, min(rows, cols)), dtype=jnp.float32)
    q, r = jnp.linalg.qr(a)
    q = q * jnp.sign(jnp.diag(r))
    q = q[:rows, :cols] if rows >= cols else q[:cols, :rows].T
    return q.astype(jnp.float32)


def init_critic_params(key, state_size, output_size, hidden_size):
    k1, k2, k3 = jax.random.split(key, 3)
    return {
        "w1": orthogonal(k1, (hidden_size, state_size)),
        "b1": jnp.zeros((hidden_size,), jnp.float32),
        "w2": orthogonal(k2, (hidden_size, hidden_size)),
        "b2": jnp.zeros((hidden_size,), jnp.float32),
        "w3": orthogonal(k3, (output_size, hidden_size)),
        "b3": jnp.zeros((output_size,), jnp.float32),
    }


# -------------------------------------------------------------- references ---
def critic_reference_f32(x, p):
    """Exact PyTorch-equivalent forward in f32."""
    h = jnp.maximum(x @ p["w1"].T + p["b1"], 0.0)
    h = jnp.maximum(h @ p["w2"].T + p["b2"], 0.0)
    return h @ p["w3"].T + p["b3"]


def critic_reference_prepped(x, prepped):
    """Same arithmetic the kernel does (compute-dtype dot inputs, f32 acc)."""
    cd = prepped["w1t"].dtype
    h = jnp.dot(x.astype(cd), prepped["w1t"],
                preferred_element_type=jnp.float32) + prepped["b1"]
    h = jnp.maximum(h, 0.0)
    h = jnp.dot(h.astype(cd), prepped["w2t"],
                preferred_element_type=jnp.float32) + prepped["b2"]
    h = jnp.maximum(h, 0.0)
    return (jnp.dot(h.astype(cd), prepped["w3c"].T,
                    preferred_element_type=jnp.float32) + prepped["b3"].T)


# -------------------------------------------------------------------- main ---
if __name__ == "__main__":
    state_size, output_size, hidden_size = 16, 1, 32
    batch = 8

    key = jax.random.PRNGKey(0)
    k_params, k_x, k_x2 = jax.random.split(key, 3)
    params = init_critic_params(k_params, state_size, output_size, hidden_size)
    x = jax.random.normal(k_x, (batch, state_size), dtype=jnp.float32)

    # --- bf16-compute path (default) ----------------------------------------
    prepped = prepare_params(params, compute_dtype=jnp.bfloat16)
    value = jax.block_until_ready(critic_forward(x, prepped))
    assert value.shape == (batch, output_size)

    ref_same = critic_reference_prepped(x, prepped)
    assert jnp.allclose(value, ref_same, atol=1e-3, rtol=1e-3), \
        "mismatch vs matched-precision reference"
    ref_f32 = critic_reference_f32(x, params)
    assert jnp.allclose(value, ref_f32, atol=5e-2, rtol=5e-2), \
        "mismatch vs f32 reference"

    # --- exact-parity f32 path -----------------------------------------------
    prepped_f32 = prepare_params(params, compute_dtype=jnp.float32)
    value_f32 = jax.block_until_ready(critic_forward(x, prepped_f32))
    assert jnp.allclose(value_f32, ref_f32, atol=1e-5, rtol=1e-5), \
        "mismatch on f32 compute path"

    # --- multi-step grid + ragged-batch padding path -------------------------
    xb = jax.random.normal(k_x2, (1000, state_size), dtype=jnp.float32)
    vb = jax.block_until_ready(critic_forward(xb, prepped, tile_b=256))
    refb = critic_reference_prepped(xb, prepped)
    assert vb.shape == (1000, output_size)
    assert jnp.allclose(vb, refb, atol=1e-3, rtol=1e-3), \
        "mismatch on multi-tile / padded-batch path"

    print("KERNEL_OK")
</pallas_src>

<mosaic_0001>
module attributes {stable_mosaic.version = 11 : i64} {
  func.func @critic_kernel(%arg0: i32, %arg1: memref<256x16xf32, #tpu.memory_space<vmem>>, %arg2: memref<16x128xbf16, #tpu.memory_space<vmem>>, %arg3: memref<1x128xf32, #tpu.memory_space<vmem>>, %arg4: memref<128x128xbf16, #tpu.memory_space<vmem>>, %arg5: memref<1x128xf32, #tpu.memory_space<vmem>>, %arg6: memref<1x128xbf16, #tpu.memory_space<vmem>>, %arg7: memref<1x1xf32, #tpu.memory_space<vmem>>, %arg8: memref<1x256xf32, #tpu.memory_space<vmem>>) attributes {dimension_semantics = [#tpu.dimension_semantics<parallel>], iteration_bounds = array<i64: 1>, scalar_prefetch = 0 : i64, scratch_operands = 0 : i64, tpu.core_type = #tpu.core_type<tc>, window_params = [{transform_indices = @transform_0, window_bounds = array<i64: 256, 16>}, {pipeline_mode = #tpu.pipeline_mode<synchronous>, transform_indices = @transform_1, window_bounds = array<i64: 16, 128>}, {pipeline_mode = #tpu.pipeline_mode<synchronous>, transform_indices = @transform_2, window_bounds = array<i64: 1, 128>}, {pipeline_mode = #tpu.pipeline_mode<synchronous>, transform_indices = @transform_3, window_bounds = array<i64: 128, 128>}, {pipeline_mode = #tpu.pipeline_mode<synchronous>, transform_indices = @transform_4, window_bounds = array<i64: 1, 128>}, {pipeline_mode = #tpu.pipeline_mode<synchronous>, transform_indices = @transform_5, window_bounds = array<i64: 1, 128>}, {pipeline_mode = #tpu.pipeline_mode<synchronous>, transform_indices = @transform_6, window_bounds = array<i64: 1, 1>}, {transform_indices = @transform_7, window_bounds = array<i64: 1, 256>}]} {
    %c0 = arith.constant 0 : index
    %c0_0 = arith.constant 0 : index
    %0 = vector.load %arg1[%c0, %c0_0] : memref<256x16xf32, #tpu.memory_space<vmem>>, vector<256x16xf32>
    %1 = arith.truncf %0 : vector<256x16xf32> to vector<256x16xbf16>
    %c0_1 = arith.constant 0 : index
    %c0_2 = arith.constant 0 : index
    %2 = vector.load %arg2[%c0_1, %c0_2] : memref<16x128xbf16, #tpu.memory_space<vmem>>, vector<16x128xbf16>
    %cst = arith.constant dense<0.000000e+00> : vector<256x128xf32>
    %3 = tpu.matmul %1, %2, %cst {dimension_numbers = #tpu.dot_dimension_numbers<[1], [0], [0], [1], [0, 0, 1, 1], [], []>} : vector<256x16xbf16>, vector<16x128xbf16>, vector<256x128xf32> -> vector<256x128xf32>
    %c0_3 = arith.constant 0 : index
    %c0_4 = arith.constant 0 : index
    %4 = vector.load %arg3[%c0_3, %c0_4] : memref<1x128xf32, #tpu.memory_space<vmem>>, vector<1x128xf32>
    %5 = vector.broadcast %4 : vector<1x128xf32> to vector<256x128xf32>
    %6 = arith.addf %3, %5 : vector<256x128xf32>
    %cst_5 = arith.constant 0.000000e+00 : f32
    %7 = vector.broadcast %cst_5 : f32 to vector<256x128xf32>
    %8 = arith.maximumf %6, %7 : vector<256x128xf32>
    %9 = arith.truncf %8 : vector<256x128xf32> to vector<256x128xbf16>
    %c0_6 = arith.constant 0 : index
    %c0_7 = arith.constant 0 : index
    %10 = vector.load %arg4[%c0_6, %c0_7] : memref<128x128xbf16, #tpu.memory_space<vmem>>, vector<128x128xbf16>
    %cst_8 = arith.constant dense<0.000000e+00> : vector<256x128xf32>
    %11 = tpu.matmul %9, %10, %cst_8 {dimension_numbers = #tpu.dot_dimension_numbers<[1], [0], [0], [1], [0, 0, 1, 1], [], []>} : vector<256x128xbf16>, vector<128x128xbf16>, vector<256x128xf32> -> vector<256x128xf32>
    %c0_9 = arith.constant 0 : index
    %c0_10 = arith.constant 0 : index
    %12 = vector.load %arg5[%c0_9, %c0_10] : memref<1x128xf32, #tpu.memory_space<vmem>>, vector<1x128xf32>
    %13 = vector.broadcast %12 : vector<1x128xf32> to vector<256x128xf32>
    %14 = arith.addf %11, %13 : vector<256x128xf32>
    %cst_11 = arith.constant 0.000000e+00 : f32
    %15 = vector.broadcast %cst_11 : f32 to vector<256x128xf32>
    %16 = arith.maximumf %14, %15 : vector<256x128xf32>
    %c0_12 = arith.constant 0 : index
    %c0_13 = arith.constant 0 : index
    %17 = vector.load %arg6[%c0_12, %c0_13] : memref<1x128xbf16, #tpu.memory_space<vmem>>, vector<1x128xbf16>
    %18 = arith.truncf %16 : vector<256x128xf32> to vector<256x128xbf16>
    %cst_14 = arith.constant dense<0.000000e+00> : vector<1x256xf32>
    %19 = tpu.matmul %17, %18, %cst_14 {dimension_numbers = #tpu.dot_dimension_numbers<[1], [1], [0], [0], [0, 0, 1, 0], [], []>} : vector<1x128xbf16>, vector<256x128xbf16>, vector<1x256xf32> -> vector<1x256xf32>
    %c0_15 = arith.constant 0 : index
    %c0_16 = arith.constant 0 : index
    %20 = vector.load %arg7[%c0_15, %c0_16] : memref<1x1xf32, #tpu.memory_space<vmem>>, vector<1x1xf32>
    %21 = vector.broadcast %20 : vector<1x1xf32> to vector<1x256xf32>
    %22 = arith.addf %19, %21 : vector<1x256xf32>
    %c0_17 = arith.constant 0 : index
    %c0_18 = arith.constant 0 : index
    %23 = vector.load %arg8[%c0_17, %c0_18] : memref<1x256xf32, #tpu.memory_space<vmem>>, vector<1x256xf32>
    tpu.vector_store %arg8[%c0_17, %c0_18], %22 {strides = array<i32>} : memref<1x256xf32, #tpu.memory_space<vmem>>, vector<1x256xf32>,
    return
  }
  func.func @transform_0(%arg0: i32) -> (i32, i32) {
    %c0_i32 = arith.constant 0 : i32
    %c0_i32_0 = arith.constant 0 : i32
    return %arg0, %c0_i32 : i32, i32
  }
  func.func @transform_1(%arg0: i32) -> (i32, i32) {
    %c0_i32 = arith.constant 0 : i32
    %c0_i32_0 = arith.constant 0 : i32
    %c0_i32_1 = arith.constant 0 : i32
    return %c0_i32, %c0_i32_0 : i32, i32
  }
  func.func @transform_2(%arg0: i32) -> (i32, i32) {
    %c0_i32 = arith.constant 0 : i32
    %c0_i32_0 = arith.constant 0 : i32
    %c0_i32_1 = arith.constant 0 : i32
    return %c0_i32, %c0_i32_0 : i32, i32
  }
  func.func @transform_3(%arg0: i32) -> (i32, i32) {
    %c0_i32 = arith.constant 0 : i32
    %c0_i32_0 = arith.constant 0 : i32
    %c0_i32_1 = arith.constant 0 : i32
    return %c0_i32, %c0_i32_0 : i32, i32
  }
  func.func @transform_4(%arg0: i32) -> (i32, i32) {
    %c0_i32 = arith.constant 0 : i32
    %c0_i32_0 = arith.constant 0 : i32
    %c0_i32_1 = arith.constant 0 : i32
    return %c0_i32, %c0_i32_0 : i32, i32
  }
  func.func @transform_5(%arg0: i32) -> (i32, i32) {
    %c0_i32 = arith.constant 0 : i32
    %c0_i32_0 = arith.constant 0 : i32
    %c0_i32_1 = arith.constant 0 : i32
    return %c0_i32, %c0_i32_0 : i32, i32
  }
  func.func @transform_6(%arg0: i32) -> (i32, i32) {
    %c0_i32 = arith.constant 0 : i32
    %c0_i32_0 = arith.constant 0 : i32
    %c0_i32_1 = arith.constant 0 : i32
    return %c0_i32, %c0_i32_0 : i32, i32
  }
  func.func @transform_7(%arg0: i32) -> (i32, i32) {
    %c0_i32 = arith.constant 0 : i32
    %c0_i32_0 = arith.constant 0 : i32
    return %c0_i32, %arg0 : i32, i32
  }
}

</mosaic_0001>

<llo_original>
// kernel: tpu_custom_call.1
$region0: #{tpu_custom_call.1}
  #allocation0 [shape = 'u32[]', space=smem, size = 0x4, offset = 0x4, fixed_abs, tag = 'smem constant byte address 0x4 - core index']
  #allocation1 [shape = 'u32[72,128]{1,0:T(1,128)}', space=vmem, size = 0x9000, scoped, tag = 'internal scratch']
  #allocation2 [shape = 'f32[1,1]{1,0:T(1,128)S(1)}', space=vmem, size = 0x200, scoped, tag = 'scoped memory for tpu_custom_call.1']
  %s0 = inlined_call_operand.vmem [shape: f32[256,16], index: 0, kind: input, shape index: {}]
  %s1 = inlined_call_operand.vmem [shape: bf16[16,128], index: 1, kind: input, shape index: {}]
  %s2 = inlined_call_operand.vmem [shape: f32[1,128], index: 2, kind: input, shape index: {}]
  %s3 = inlined_call_operand.vmem [shape: bf16[128,128], index: 3, kind: input, shape index: {}]
  %s4 = inlined_call_operand.vmem [shape: f32[1,128], index: 4, kind: input, shape index: {}]
  %s5 = inlined_call_operand.vmem [shape: bf16[1,128], index: 5, kind: input, shape index: {}]
  %s6 = inlined_call_operand.<no memory space> [shape: f32[1,1], index: 6, kind: input, shape index: {}]
  %s7 = inlined_call_operand.hbm [shape: f32[1,256], index: 7, kind: output, shape index: {}]
  %s8 = sld [smem:[#allocation0]]
  $region38: #{tpu_custom_call.1} parent=0
    _
  %s10 = ssub.s32 1, %s8
  %s11 = scalar_select 0, %s10, %s8
  %v12 = vstv %s6
  %13 = vst [vmem:[#allocation2] sm:$0x1] %v12
  $region1: #{tpu_custom_call.1} parent=0
    #allocation3 [shape = 'u8[1024]{0}', space=vmem, size = 0x400, scoped, tag = 'output window, operand 0, single buffered']
    #allocation4 [shape = 's32[1]{0}', space=sflag, size = 0x4, scoped, tag = 'scoped memory for tpu_custom_call.1']
    %14 = vsyncpa [#allocation4], 0
    // Predicated region
    $region2: #{tpu_custom_call.1} parent=1 // pred_check
      _
    $region3: #{tpu_custom_call.1} parent=1 // pred_check_branch
      %16 = sbr.rel (0) target = $region5
    $region4: #{tpu_custom_call.1} parent=1 // pred_region
      _
    $region5: #{tpu_custom_call.1} parent=1 // pred_fallthru
      _
    // Predicated region
    $region6: #{tpu_custom_call.1} parent=1 // pred_check
      _
    $region7: #{tpu_custom_call.1} parent=1 // pred_check_branch
      %18 = sbr.rel (0) target = $region9
    $region8: #{tpu_custom_call.1} parent=1 // pred_region
      _
    $region9: #{tpu_custom_call.1} parent=1 // pred_fallthru
      _
    // Predicated region
    $region10: #{tpu_custom_call.1} parent=1 // pred_check
      _
    $region11: #{tpu_custom_call.1} parent=1 // pred_check_branch
      %20 = sbr.rel (0) target = $region13
    $region12: #{tpu_custom_call.1} parent=1 // pred_region
      _
    $region13: #{tpu_custom_call.1} parent=1 // pred_fallthru
      _
    // Predicated region
    $region14: #{tpu_custom_call.1} parent=1 // pred_check
      _
    $region15: #{tpu_custom_call.1} parent=1 // pred_check_branch
      %22 = sbr.rel (0) target = $region17
    $region16: #{tpu_custom_call.1} parent=1 // pred_region
      _
    $region17: #{tpu_custom_call.1} parent=1 // pred_fallthru
      _
    // Predicated region
    $region18: #{tpu_custom_call.1} parent=1 // pred_check
      _
    $region19: #{tpu_custom_call.1} parent=1 // pred_check_branch
      %24 = sbr.rel (0) target = $region21
    $region20: #{tpu_custom_call.1} parent=1 // pred_region
      _
    $region21: #{tpu_custom_call.1} parent=1 // pred_fallthru
      _
    // Predicated region
    $region22: #{tpu_custom_call.1} parent=1 // pred_check
      _
    $region23: #{tpu_custom_call.1} parent=1 // pred_check_branch
      %26 = sbr.rel (0) target = $region25
    $region24: #{tpu_custom_call.1} parent=1 // pred_region
      _
    $region25: #{tpu_custom_call.1} parent=1 // pred_fallthru
      _
    // Predicated region
    $region26: #{tpu_custom_call.1} parent=1 // pred_check
      _
    $region27: #{tpu_custom_call.1} parent=1 // pred_check_branch
      %28 = sbr.rel (0) target = $region29
    $region28: #{tpu_custom_call.1} parent=1 // pred_region
      _
    $region29: #{tpu_custom_call.1} parent=1 // pred_fallthru
      _
    %v30 = vld [vmem:[%s0] sm:$0xff]
    %v31 = vld [vmem:[%s0 + $0x8] sm:$0xff]
    %v32 = vld [vmem:[%s0 + $0x10] sm:$0xff]
    %v33 = vld [vmem:[%s0 + $0x18] sm:$0xff]
    %v34 = vld [vmem:[%s0 + $0x20] sm:$0xff]
    %v35 = vld [vmem:[%s0 + $0x28] sm:$0xff]
    %v36 = vld [vmem:[%s0 + $0x30] sm:$0xff]
    %v37 = vld [vmem:[%s0 + $0x38] sm:$0xff]
    %v38 = vld [vmem:[%s0 + $0x40] sm:$0xff]
    %v39 = vld [vmem:[%s0 + $0x48] sm:$0xff]
    %v40 = vld [vmem:[%s0 + $0x50] sm:$0xff]
    %v41 = vld [vmem:[%s0 + $0x58] sm:$0xff]
    %v42 = vld [vmem:[%s0 + $0x60] sm:$0xff]
    %v43 = vld [vmem:[%s0 + $0x68] sm:$0xff]
    %v44 = vld [vmem:[%s0 + $0x70] sm:$0xff]
    %v45 = vld [vmem:[%s0 + $0x78] sm:$0xff]
    %v46 = vld [vmem:[%s0 + $0x80] sm:$0xff]
    %v47 = vld [vmem:[%s0 + $0x88] sm:$0xff]
    %v48 = vld [vmem:[%s0 + $0x90] sm:$0xff]
    %v49 = vld [vmem:[%s0 + $0x98] sm:$0xff]
    %v50 = vld [vmem:[%s0 + $0xa0] sm:$0xff]
    %v51 = vld [vmem:[%s0 + $0xa8] sm:$0xff]
    %v52 = vld [vmem:[%s0 + $0xb0] sm:$0xff]
    %v53 = vld [vmem:[%s0 + $0xb8] sm:$0xff]
    %v54 = vld [vmem:[%s0 + $0xc0] sm:$0xff]
    %v55 = vld [vmem:[%s0 + $0xc8] sm:$0xff]
    %v56 = vld [vmem:[%s0 + $0xd0] sm:$0xff]
    %v57 = vld [vmem:[%s0 + $0xd8] sm:$0xff]
    %v58 = vld [vmem:[%s0 + $0xe0] sm:$0xff]
    %v59 = vld [vmem:[%s0 + $0xe8] sm:$0xff]
    %v60 = vld [vmem:[%s0 + $0xf0] sm:$0xff]
    %v61 = vld [vmem:[%s0 + $0xf8] sm:$0xff]
    %v62 = vpack.c.bf16 %v31, %v30
    %v63 = vpack.c.bf16 %v33, %v32
    %v64 = vpack.c.bf16 %v35, %v34
    %v65 = vpack.c.bf16 %v37, %v36
    %v66 = vpack.c.bf16 %v39, %v38
    %v67 = vpack.c.bf16 %v41, %v40
    %v68 = vpack.c.bf16 %v43, %v42
    %v69 = vpack.c.bf16 %v45, %v44
    %v70 = vpack.c.bf16 %v47, %v46
    %v71 = vpack.c.bf16 %v49, %v48
    %v72 = vpack.c.bf16 %v51, %v50
    %v73 = vpack.c.bf16 %v53, %v52
    %v74 = vpack.c.bf16 %v55, %v54
    %v75 = vpack.c.bf16 %v57, %v56
    %v76 = vpack.c.bf16 %v59, %v58
    %v77 = vpack.c.bf16 %v61, %v60
    %v78 = vld [vmem:[%s1] sm:$0xf]
    %v79 = vld [vmem:[%s1 + $0x4] sm:$0xf]
    %v80 = vld [vmem:[%s2] sm:$0x1]
    %v82 = vperm.slane %v80, 0
    %v86 = vunpack.c.l.b16 %v78
    %v87 = vunpack.c.l.b16 %v79
    %v88 = vpack.c.b16 %v87, %v86
    %vm90 = vcmask 130048
    %v92 = vsel %vm90, %v62, 0
    %v95 = vsel %vm90, %v63, 0
    %v98 = vsel %vm90, %v64, 0
    %v101 = vsel %vm90, %v65, 0
    %v104 = vsel %vm90, %v66, 0
    %v107 = vsel %vm90, %v67, 0
    %v110 = vsel %vm90, %v68, 0
    %v113 = vsel %vm90, %v69, 0
    %v116 = vsel %vm90, %v70, 0
    %v119 = vsel %vm90, %v71, 0
    %v122 = vsel %vm90, %v72, 0
    %v125 = vsel %vm90, %v73, 0
    %v128 = vsel %vm90, %v74, 0
    %v131 = vsel %vm90, %v75, 0
    %v134 = vsel %vm90, %v76, 0
    %v137 = vsel %vm90, %v77, 0
    %139 = vmatpush.bf16.msra.mxu0 0
    %140 = vmatpush.bf16.msra.mxu0 0
    %141 = vmatpush.bf16.msra.mxu0 0
    %142 = vmatpush.bf16.msra.mxu0 0
    %143 = vmatpush.bf16.msra.mxu0 0
    %144 = vmatpush.bf16.msra.mxu0 0
    %145 = vmatpush.bf16.msra.mxu0 0
    %146 = vmatpush.bf16.msra.mxu0 %v88
    %147 = vmatmul.bf16.gmra.mxu0 %v92
    %v148 = vpop.f32.mrf.mxu0
    %v149 = vadd.f32 %v82, %v148
    %v150 = vpop.f32.mrf.mxu0
    %v151 = vadd.f32 %v82, %v150
    %152 = vmatmul.bf16.gmra.mxu0 %v95
    %v153 = vpop.f32.mrf.mxu0
    %v154 = vadd.f32 %v82, %v153
    %v155 = vpop.f32.mrf.mxu0
    %v156 = vadd.f32 %v82, %v155
    %157 = vmatmul.bf16.gmra.mxu0 %v98
    %v158 = vpop.f32.mrf.mxu0
    %v159 = vadd.f32 %v82, %v158
    %v160 = vpop.f32.mrf.mxu0
    %v161 = vadd.f32 %v82, %v160
    %162 = vmatmul.bf16.gmra.mxu0 %v101
    %v163 = vpop.f32.mrf.mxu0
    %v164 = vadd.f32 %v82, %v163
    %v165 = vpop.f32.mrf.mxu0
    %v166 = vadd.f32 %v82, %v165
    %167 = vmatmul.bf16.gmra.mxu0 %v104
    %v168 = vpop.f32.mrf.mxu0
    %v169 = vadd.f32 %v82, %v168
    %v170 = vpop.f32.mrf.mxu0
    %v171 = vadd.f32 %v82, %v170
    %172 = vmatmul.bf16.gmra.mxu0 %v107
    %v173 = vpop.f32.mrf.mxu0
    %v174 = vadd.f32 %v82, %v173
    %v175 = vpop.f32.mrf.mxu0
    %v176 = vadd.f32 %v82, %v175
    %177 = vmatmul.bf16.gmra.mxu0 %v110
    %v178 = vpop.f32.mrf.mxu0
    %v179 = vadd.f32 %v82, %v178
    %v180 = vpop.f32.mrf.mxu0
    %v181 = vadd.f32 %v82, %v180
    %182 = vmatmul.bf16.gmra.mxu0 %v113
    %v183 = vpop.f32.mrf.mxu0
    %v184 = vadd.f32 %v82, %v183
    %v185 = vpop.f32.mrf.mxu0
    %v186 = vadd.f32 %v82, %v185
    %187 = vmatmul.bf16.gmra.mxu0 %v116
    %v188 = vpop.f32.mrf.mxu0
    %v189 = vadd.f32 %v82, %v188
    %v190 = vpop.f32.mrf.mxu0
    %v191 = vadd.f32 %v82, %v190
    %192 = vmatmul.bf16.gmra.mxu0 %v119
    %v193 = vpop.f32.mrf.mxu0
    %v194 = vadd.f32 %v82, %v193
    %v195 = vpop.f32.mrf.mxu0
    %v196 = vadd.f32 %v82, %v195
    %197 = vmatmul.bf16.gmra.mxu0 %v122
    %v198 = vpop.f32.mrf.mxu0
    %v199 = vadd.f32 %v82, %v198
    %v200 = vpop.f32.mrf.mxu0
    %v201 = vadd.f32 %v82, %v200
    %202 = vmatmul.bf16.gmra.mxu0 %v125
    %v203 = vpop.f32.mrf.mxu0
    %v204 = vadd.f32 %v82, %v203
    %v205 = vpop.f32.mrf.mxu0
    %v206 = vadd.f32 %v82, %v205
    %207 = vmatmul.bf16.gmra.mxu0 %v128
    %v208 = vpop.f32.mrf.mxu0
    %v209 = vadd.f32 %v82, %v208
    %v210 = vpop.f32.mrf.mxu0
    %v211 = vadd.f32 %v82, %v210
    %212 = vmatmul.bf16.gmra.mxu0 %v131
    %v213 = vpop.f32.mrf.mxu0
    %v214 = vadd.f32 %v82, %v213
    %v215 = vpop.f32.mrf.mxu0
    %v216 = vadd.f32 %v82, %v215
    %217 = vmatmul.bf16.gmra.mxu0 %v134
    %v218 = vpop.f32.mrf.mxu0
    %v219 = vadd.f32 %v82, %v218
    %v220 = vpop.f32.mrf.mxu0
    %v221 = vadd.f32 %v82, %v220
    %222 = vmatmul.bf16.gmra.mxu0 %v137
    %v223 = vpop.f32.mrf.mxu0
    %v224 = vadd.f32 %v82, %v223
    %v225 = vpop.f32.mrf.mxu0
    %v226 = vadd.f32 %v82, %v225
    %227 = vdwg.mxu0
    %v228 = vmax.f32 %v149, 0.0
    %v229 = vmax.f32 %v151, 0.0
    %v230 = vmax.f32 %v154, 0.0
    %v231 = vmax.f32 %v156, 0.0
    %v232 = vmax.f32 %v159, 0.0
    %v233 = vmax.f32 %v161, 0.0
    %v234 = vmax.f32 %v164, 0.0
    %v235 = vmax.f32 %v166, 0.0
    %v236 = vmax.f32 %v169, 0.0
    %v237 = vmax.f32 %v171, 0.0
    %v238 = vmax.f32 %v174, 0.0
    %v239 = vmax.f32 %v176, 0.0
    %v240 = vmax.f32 %v179, 0.0
    %v241 = vmax.f32 %v181, 0.0
    %v242 = vmax.f32 %v184, 0.0
    %v243 = vmax.f32 %v186, 0.0
    %v244 = vmax.f32 %v189, 0.0
    %v245 = vmax.f32 %v191, 0.0
    %v246 = vmax.f32 %v194, 0.0
    %v247 = vmax.f32 %v196, 0.0
    %v248 = vmax.f32 %v199, 0.0
    %v249 = vmax.f32 %v201, 0.0
    %v250 = vmax.f32 %v204, 0.0
    %v251 = vmax.f32 %v206, 0.0
    %v252 = vmax.f32 %v209, 0.0
    %v253 = vmax.f32 %v211, 0.0
    %v254 = vmax.f32 %v214, 0.0
    %v255 = vmax.f32 %v216, 0.0
    %v256 = vmax.f32 %v219, 0.0
    %v257 = vmax.f32 %v221, 0.0
    %v258 = vmax.f32 %v224, 0.0
    %v259 = vmax.f32 %v226, 0.0
    %v260 = vpack.c.bf16 %v229, %v228
    %v261 = vpack.c.bf16 %v231, %v230
    %v262 = vpack.c.bf16 %v233, %v232
    %v263 = vpack.c.bf16 %v235, %v234
    %v264 = vpack.c.bf16 %v237, %v236
    %v265 = vpack.c.bf16 %v239, %v238
    %v266 = vpack.c.bf16 %v241, %v240
    %v267 = vpack.c.bf16 %v243, %v242
    %v268 = vpack.c.bf16 %v245, %v244
    %v269 = vpack.c.bf16 %v247, %v246
    %v270 = vpack.c.bf16 %v249, %v248
    %v271 = vpack.c.bf16 %v251, %v250
    %v272 = vpack.c.bf16 %v253, %v252
    %v273 = vpack.c.bf16 %v255, %v254
    %v274 = vpack.c.bf16 %v257, %v256
    %v275 = vpack.c.bf16 %v259, %v258
    %v276 = vld [vmem:[%s3] sm:$0xf]
    %v277 = vld [vmem:[%s3 + $0x4] sm:$0xf]
    %v278 = vld [vmem:[%s3 + $0x8] sm:$0xf]
    %v279 = vld [vmem:[%s3 + $0xc] sm:$0xf]
    %v280 = vld [vmem:[%s3 + $0x10] sm:$0xf]
    %v281 = vld [vmem:[%s3 + $0x14] sm:$0xf]
    %v282 = vld [vmem:[%s3 + $0x18] sm:$0xf]
    %v283 = vld [vmem:[%s3 + $0x1c] sm:$0xf]
    %v284 = vld [vmem:[%s3 + $0x20] sm:$0xf]
    %v285 = vld [vmem:[%s3 + $0x24] sm:$0xf]
    %v286 = vld [vmem:[%s3 + $0x28] sm:$0xf]
    %v287 = vld [vmem:[%s3 + $0x2c] sm:$0xf]
    %v288 = vld [vmem:[%s3 + $0x30] sm:$0xf]
    %v289 = vld [vmem:[%s3 + $0x34] sm:$0xf]
    %v290 = vld [vmem:[%s3 + $0x38] sm:$0xf]
    %v291 = vld [vmem:[%s3 + $0x3c] sm:$0xf]
    %v292 = vld [vmem:[%s4] sm:$0x1]
    %v294 = vperm.slane %v292, 0
    %v312 = vunpack.c.l.b16 %v276
    %v313 = vunpack.c.l.b16 %v277
    %v314 = vunpack.c.l.b16 %v278
    %v315 = vunpack.c.l.b16 %v279
    %v316 = vunpack.c.l.b16 %v280
    %v317 = vunpack.c.l.b16 %v281
    %v318 = vunpack.c.l.b16 %v282
    %v319 = vunpack.c.l.b16 %v283
    %v320 = vunpack.c.l.b16 %v284
    %v321 = vunpack.c.l.b16 %v285
    %v322 = vunpack.c.l.b16 %v286
    %v323 = vunpack.c.l.b16 %v287
    %v324 = vunpack.c.l.b16 %v288
    %v325 = vunpack.c.l.b16 %v289
    %v326 = vunpack.c.l.b16 %v290
    %v327 = vunpack.c.l.b16 %v291
    %v328 = vpack.c.b16 %v313, %v312
    %v329 = vpack.c.b16 %v315, %v314
    %v330 = vpack.c.b16 %v317, %v316
    %v331 = vpack.c.b16 %v319, %v318
    %v332 = vpack.c.b16 %v321, %v320
    %v333 = vpack.c.b16 %v323, %v322
    %v334 = vpack.c.b16 %v325, %v324
    %v335 = vpack.c.b16 %v327, %v326
    %344 = vmatpush.bf16.msra.mxu0 %v335
    %345 = vmatpush.bf16.msra.mxu0 %v334
    %346 = vmatpush.bf16.msra.mxu0 %v333
    %347 = vmatpush.bf16.msra.mxu0 %v332
    %348 = vmatpush.bf16.msra.mxu0 %v331
    %349 = vmatpush.bf16.msra.mxu0 %v330
    %350 = vmatpush.bf16.msra.mxu0 %v329
    %351 = vmatpush.bf16.msra.mxu0 %v328
    %352 = vmatmul.bf16.gmra.mxu0 %v260
    %v353 = vpop.f32.mrf.mxu0
    %v354 = vadd.f32 %v294, %v353
    %v355 = vpop.f32.mrf.mxu0
    %v356 = vadd.f32 %v294, %v355
    %357 = vmatmul.bf16.gmra.mxu0 %v261
    %v358 = vpop.f32.mrf.mxu0
    %v359 = vadd.f32 %v294, %v358
    %v360 = vpop.f32.mrf.mxu0
    %v361 = vadd.f32 %v294, %v360
    %362 = vmatmul.bf16.gmra.mxu0 %v262
    %v363 = vpop.f32.mrf.mxu0
    %v364 = vadd.f32 %v294, %v363
    %v365 = vpop.f32.mrf.mxu0
    %v366 = vadd.f32 %v294, %v365
    %367 = vmatmul.bf16.gmra.mxu0 %v263
    %v368 = vpop.f32.mrf.mxu0
    %v369 = vadd.f32 %v294, %v368
    %v370 = vpop.f32.mrf.mxu0
    %v371 = vadd.f32 %v294, %v370
    %372 = vmatmul.bf16.gmra.mxu0 %v264
    %v373 = vpop.f32.mrf.mxu0
    %v374 = vadd.f32 %v294, %v373
    %v375 = vpop.f32.mrf.mxu0
    %v376 = vadd.f32 %v294, %v375
    %377 = vmatmul.bf16.gmra.mxu0 %v265
    %v378 = vpop.f32.mrf.mxu0
    %v379 = vadd.f32 %v294, %v378
    %v380 = vpop.f32.mrf.mxu0
    %v381 = vadd.f32 %v294, %v380
    %382 = vmatmul.bf16.gmra.mxu0 %v266
    %v383 = vpop.f32.mrf.mxu0
    %v384 = vadd.f32 %v294, %v383
    %v385 = vpop.f32.mrf.mxu0
    %v386 = vadd.f32 %v294, %v385
    %387 = vmatmul.bf16.gmra.mxu0 %v267
    %v388 = vpop.f32.mrf.mxu0
    %v389 = vadd.f32 %v294, %v388
    %v390 = vpop.f32.mrf.mxu0
    %v391 = vadd.f32 %v294, %v390
    %392 = vmatmul.bf16.gmra.mxu0 %v268
    %v393 = vpop.f32.mrf.mxu0
    %v394 = vadd.f32 %v294, %v393
    %v395 = vpop.f32.mrf.mxu0
    %v396 = vadd.f32 %v294, %v395
    %397 = vmatmul.bf16.gmra.mxu0 %v269
    %v398 = vpop.f32.mrf.mxu0
    %v399 = vadd.f32 %v294, %v398
    %v400 = vpop.f32.mrf.mxu0
    %v401 = vadd.f32 %v294, %v400
    %402 = vmatmul.bf16.gmra.mxu0 %v270
    %v403 = vpop.f32.mrf.mxu0
    %v404 = vadd.f32 %v294, %v403
    %v405 = vpop.f32.mrf.mxu0
    %v406 = vadd.f32 %v294, %v405
    %407 = vmatmul.bf16.gmra.mxu0 %v271
    %v408 = vpop.f32.mrf.mxu0
    %v409 = vadd.f32 %v294, %v408
    %v410 = vpop.f32.mrf.mxu0
    %v411 = vadd.f32 %v294, %v410
    %412 = vmatmul.bf16.gmra.mxu0 %v272
    %v413 = vpop.f32.mrf.mxu0
    %v414 = vadd.f32 %v294, %v413
    %v415 = vpop.f32.mrf.mxu0
    %v416 = vadd.f32 %v294, %v415
    %417 = vmatmul.bf16.gmra.mxu0 %v273
    %v418 = vpop.f32.mrf.mxu0
    %v419 = vadd.f32 %v294, %v418
    %v420 = vpop.f32.mrf.mxu0
    %v421 = vadd.f32 %v294, %v420
    %422 = vmatmul.bf16.gmra.mxu0 %v274
    %v423 = vpop.f32.mrf.mxu0
    %v424 = vadd.f32 %v294, %v423
    %v425 = vpop.f32.mrf.mxu0
    %v426 = vadd.f32 %v294, %v425
    %427 = vmatmul.bf16.gmra.mxu0 %v275
    %v428 = vpop.f32.mrf.mxu0
    %v429 = vadd.f32 %v294, %v428
    %v430 = vpop.f32.mrf.mxu0
    %v431 = vadd.f32 %v294, %v430
    %432 = vdwg.mxu0
    %v433 = vmax.f32 %v354, 0.0
    %v434 = vmax.f32 %v356, 0.0
    %v435 = vmax.f32 %v359, 0.0
    %v436 = vmax.f32 %v361, 0.0
    %v437 = vmax.f32 %v364, 0.0
    %v438 = vmax.f32 %v366, 0.0
    %v439 = vmax.f32 %v369, 0.0
    %v440 = vmax.f32 %v371, 0.0
    %v441 = vmax.f32 %v374, 0.0
    %v442 = vmax.f32 %v376, 0.0
    %v443 = vmax.f32 %v379, 0.0
    %v444 = vmax.f32 %v381, 0.0
    %v445 = vmax.f32 %v384, 0.0
    %v446 = vmax.f32 %v386, 0.0
    %v447 = vmax.f32 %v389, 0.0
    %v448 = vmax.f32 %v391, 0.0
    %v449 = vmax.f32 %v394, 0.0
    %v450 = vmax.f32 %v396, 0.0
    %v451 = vmax.f32 %v399, 0.0
    %v452 = vmax.f32 %v401, 0.0
    %v453 = vmax.f32 %v404, 0.0
    %v454 = vmax.f32 %v406, 0.0
    %v455 = vmax.f32 %v409, 0.0
    %v456 = vmax.f32 %v411, 0.0
    %v457 = vmax.f32 %v414, 0.0
    %v458 = vmax.f32 %v416, 0.0
    %v459 = vmax.f32 %v419, 0.0
    %v460 = vmax.f32 %v421, 0.0
    %v461 = vmax.f32 %v424, 0.0
    %v462 = vmax.f32 %v426, 0.0
    %v463 = vmax.f32 %v429, 0.0
    %v464 = vmax.f32 %v431, 0.0
    %v465 = vld [vmem:[%s5] sm:$0x1]
    %v466 = vpack.c.bf16 %v434, %v433
    %v467 = vpack.c.bf16 %v436, %v435
    %v468 = vpack.c.bf16 %v438, %v437
    %v469 = vpack.c.bf16 %v440, %v439
    %v470 = vpack.c.bf16 %v442, %v441
    %v471 = vpack.c.bf16 %v444, %v443
    %v472 = vpack.c.bf16 %v446, %v445
    %v473 = vpack.c.bf16 %v448, %v447
    %v474 = vpack.c.bf16 %v450, %v449
    %v475 = vpack.c.bf16 %v452, %v451
    %v476 = vpack.c.bf16 %v454, %v453
    %v477 = vpack.c.bf16 %v456, %v455
    %v478 = vpack.c.bf16 %v458, %v457
    %v479 = vpack.c.bf16 %v460, %v459
    %v480 = vpack.c.bf16 %v462, %v461
    %v481 = vpack.c.bf16 %v464, %v463
    %v482 = vld [vmem:[#allocation2] sm:$0x1]
    %484 = vset.pattern.permute.xlu0 0
    %485 = vperm.xlu0 %484, %v482
    %v486 = vpop.permute.xlu0 %485
    %v488 = vperm.slane %v486, 0
    %489 = vmatpush.bf16.xpose.msra.mxu0 %v473
    %490 = vmatpush.bf16.xpose.msra.mxu0 %v472
    %491 = vmatpush.bf16.xpose.msra.mxu0 %v471
    %492 = vmatpush.bf16.xpose.msra.mxu0 %v470
    %493 = vmatpush.bf16.xpose.msra.mxu0 %v469
    %494 = vmatpush.bf16.xpose.msra.mxu0 %v468
    %495 = vmatpush.bf16.xpose.msra.mxu0 %v467
    %496 = vmatpush.bf16.xpose.msra.mxu0 %v466
    %497 = vmatmul.bf16.gmra.mxu0 %v465
    %v498 = vpop.f32.mrf.mxu0
    %v499 = vadd.f32 %v488, %v498
    %v500 = vpop.f32.mrf.mxu0
    %501 = vdwg.mxu0
    %502 = vmatpush.bf16.xpose.msra.mxu0 %v481
    %503 = vmatpush.bf16.xpose.msra.mxu0 %v480
    %504 = vmatpush.bf16.xpose.msra.mxu0 %v479
    %505 = vmatpush.bf16.xpose.msra.mxu0 %v478
    %506 = vmatpush.bf16.xpose.msra.mxu0 %v477
    %507 = vmatpush.bf16.xpose.msra.mxu0 %v476
    %508 = vmatpush.bf16.xpose.msra.mxu0 %v475
    %509 = vmatpush.bf16.xpose.msra.mxu0 %v474
    %510 = vmatmul.bf16.gmra.mxu0 %v465
    %v511 = vpop.f32.mrf.mxu0
    %v512 = vadd.f32 %v488, %v511
    %v513 = vpop.f32.mrf.mxu0
    %514 = vdwg.mxu0
    %v517 = vrot.slane %v512, 7
    %vm518 = vcmask 1040384
    %v519 = vsel %vm518, %v499, %v517
    %v521 = vlaneseq
    %vm522 = vcmp.ge.s32.totalorder %v521, 0
    %vm523 = vcmp.lt.s32.totalorder %v521, 256
    %vm524 = vmand %vm522, %vm523
    %525 = vst.msk [vmem:[#allocation3] sm:$0x3] %vm524, %v519
    // Predicated region
    $region30: #{tpu_custom_call.1} parent=1 // pred_check
      _
    $region31: #{tpu_custom_call.1} parent=1 // pred_check_branch
      %527 = sbr.rel (0) target = $region33
    $region32: #{tpu_custom_call.1} parent=1 // pred_region
      %529 = vsyncadd [#allocation4], 0
      %s531 = sshll.u32 [#allocation3], 4
      %s532 = int_to_ptr.vmem [resolvable:$true] %s531
      %s533 = sshll.u32 %s7, 4
      %s534 = int_to_ptr.hbm [resolvable:$true] %s533
      %536 = dma.vmem_to_hbm [thread:$0]  %s532, 32, %s534, [#allocation4]
    $region33: #{tpu_custom_call.1} parent=1 // pred_fallthru
      _
    // Predicated region
    $region34: #{tpu_custom_call.1} parent=1 // pred_check
      _
    $region35: #{tpu_custom_call.1} parent=1 // pred_check_branch
      %538 = sbr.rel (0) target = $region37
    $region36: #{tpu_custom_call.1} parent=1 // pred_region
      %540 = dma.done [#allocation4], 32
    $region37: #{tpu_custom_call.1} parent=1 // pred_fallthru
      _
    %541 = vsyncpa [#allocation4], 1

</llo_original>
